<compile_context>
chip_gen: v5e
topology: v5e:2x2
jax: 0.10.0
libtpu: 0.0.40
codegen_flags: <defaults>
</compile_context>

<pallas_src>
import jax
import jax.numpy as jnp
from jax.experimental import pallas as pl
from jax.experimental.pallas import tpu as pltpu


def _round_up(x, m):
    return (x + m - 1) // m * m


# --------------------------------------------------------------------------
# Pass 1: per-column sum of squares (reduction over all N rows).
# --------------------------------------------------------------------------
def _col_sumsq_kernel(feat_ref, sq_ref, acc_ref):
    @pl.when(pl.program_id(0) == 0)
    def _init():
        acc_ref[...] = jnp.zeros_like(acc_ref)

    x = feat_ref[...]                                     # (tm, C) f32
    acc_ref[...] += jnp.sum(x * x, axis=0, keepdims=True)

    @pl.when(pl.program_id(0) == pl.num_programs(0) - 1)
    def _done():
        sq_ref[...] = acc_ref[...]


# --------------------------------------------------------------------------
# Pass 2: neighbor row-gather + fused per-column scaling.
#   nbr_ref  : SMEM (N_pad*K,) int32    (scalar prefetch)
#   mult_ref : VMEM (1, (K+1)*C) f32    per-output-column multiplier
#   feat_ref : VMEM (N_pad, C) f32      raw features, resident for the whole grid
#   out_ref  : VMEM (tm, (K+1)*C) f32   output row tile
# --------------------------------------------------------------------------
def _gather_kernel(nbr_ref, mult_ref, feat_ref, out_ref):
    n_pad, C = feat_ref.shape
    tm = out_ref.shape[0]
    K = out_ref.shape[1] // C - 1
    base = pl.program_id(0) * tm

    def body(r, carry):
        row = base + r
        for k in range(K):                                # K small & static -> unrolled
            idx = nbr_ref[row * K + k]
            idx = jnp.where(idx == 0, row, idx)           # empty neighbor -> self row
            idx = jnp.clip(idx, 0, n_pad - 1)
            out_ref[pl.ds(r, 1), k * C:(k + 1) * C] = feat_ref[pl.ds(idx, 1), :]
        out_ref[pl.ds(r, 1), K * C:] = feat_ref[pl.ds(row, 1), :]
        return carry

    jax.lax.fori_loop(0, tm, body, 0)

    # fused /255 + column-wise L2 normalization, applied once to the whole tile
    out_ref[...] = out_ref[...] * mult_ref[...]


def baseline_color(points_features, points_neighbor, *, row_tile=256):
    """JAX/Pallas equivalent of Baseline_color.forward (functional, no in-place mutation)."""
    if points_features.shape[0] == 0:
        return points_features

    feat = points_features.astype(jnp.float32)
    nbr = points_neighbor.astype(jnp.int32)
    N, C = feat.shape
    K = nbr.shape[1]

    tm = _round_up(min(row_tile, _round_up(N, 8)), 8)
    n_pad = _round_up(N, tm)
    if n_pad != N:
        feat = jnp.pad(feat, ((0, n_pad - N), (0, 0)))
        nbr = jnp.pad(nbr, ((0, n_pad - N), (0, 0)))
    n_tiles = n_pad // tm

    # ---- pass 1: column-wise sum of squares (padded rows are zeros -> no effect) ----
    sumsq = pl.pallas_call(
        _col_sumsq_kernel,
        out_shape=jax.ShapeDtypeStruct((1, C), jnp.float32),
        grid_spec=pltpu.PrefetchScalarGridSpec(
            num_scalar_prefetch=0,
            grid=(n_tiles,),
            in_specs=[pl.BlockSpec((tm, C), lambda i: (i, 0))],
            out_specs=pl.BlockSpec((1, C), lambda i: (0, 0)),
            scratch_shapes=[pltpu.VMEM((1, C), jnp.float32)],
        ),
        compiler_params=pltpu.CompilerParams(
            dimension_semantics=("arbitrary",)),
    )(feat)

    # combined per-column multiplier: rgb cols -> 1/255, others -> 1/max(||col||, 1e-12)
    col = jnp.arange(C)
    inv_norm = jax.lax.rsqrt(jnp.maximum(sumsq[0], 1e-24))
    mult = jnp.where((col >= 3) & (col < 6), jnp.float32(1.0 / 255.0), inv_norm)
    mult_tiled = jnp.tile(mult, K + 1)[None, :].astype(jnp.float32)   # (1, (K+1)*C)

    # VMEM budget: resident lane-padded feature table (x2 buffers) + output tile (x2).
    feat_vmem = 2 * n_pad * _round_up(C, 128) * 4
    out_vmem = 2 * tm * _round_up((K + 1) * C, 128) * 4
    vmem_limit = int(min(64 << 20, max(32 << 20, feat_vmem + out_vmem + (4 << 20))))
    # TODO(synk): for very large N (feature table approaching the VMEM limit) page the
    # feature table from HBM with manual double-buffered DMA instead of full residency.

    out = pl.pallas_call(
        _gather_kernel,
        out_shape=jax.ShapeDtypeStruct((n_pad, (K + 1) * C), jnp.float32),
        grid_spec=pltpu.PrefetchScalarGridSpec(
            num_scalar_prefetch=1,
            grid=(n_tiles,),
            in_specs=[
                pl.BlockSpec((1, (K + 1) * C), lambda i, nbr_s: (0, 0)),   # multiplier
                pl.BlockSpec((n_pad, C), lambda i, nbr_s: (0, 0)),         # resident feat
            ],
            out_specs=pl.BlockSpec((tm, (K + 1) * C), lambda i, nbr_s: (i, 0)),
        ),
        compiler_params=pltpu.CompilerParams(
            dimension_semantics=("parallel",),
            vmem_limit_bytes=vmem_limit),
    )(nbr.reshape(-1), mult_tiled, feat)

    return out[:N]


def _reference(points_features, points_neighbor):
    """Plain-JAX reference mirroring the PyTorch code."""
    feat = points_features.astype(jnp.float32)
    feat = feat.at[:, 3:6].divide(255.0)

    def norml(x):
        n = jnp.sqrt(jnp.sum(x * x, axis=0, keepdims=True))
        return x / jnp.maximum(n, 1e-12)

    feat = feat.at[:, :3].set(norml(feat[:, :3]))
    feat = feat.at[:, 6:].set(norml(feat[:, 6:]))

    nbr = points_neighbor.astype(jnp.int32)
    N, K = nbr.shape
    row = jnp.broadcast_to(jnp.arange(N, dtype=jnp.int32)[:, None], (N, K))
    nbr = jnp.where(nbr == 0, row, nbr)
    gathered = feat[nbr.reshape(-1)].reshape(N, K * feat.shape[1])
    return jnp.concatenate([gathered, feat], axis=-1)


if __name__ == "__main__":
    def run_case(seed, N, C, K, row_tile=256):
        key = jax.random.fold_in(jax.random.PRNGKey(0), seed)
        k_xyz, k_rgb, k_extra, k_nbr = jax.random.split(key, 4)
        xyz = jax.random.uniform(k_xyz, (N, 3), jnp.float32, minval=-40.0, maxval=40.0)
        rgb = jax.random.uniform(k_rgb, (N, 3), jnp.float32, minval=0.0, maxval=255.0)
        extra = jax.random.uniform(k_extra, (N, C - 6), jnp.float32, minval=-1.0, maxval=1.0)
        feats = jnp.concatenate([xyz, rgb, extra], axis=-1)

        nbr = jax.random.randint(k_nbr, (N, K), 0, N, dtype=jnp.int32)
        # make sure some entries are exactly 0 to exercise the "empty neighbor" fixup
        nbr = nbr.at[0, 0].set(0).at[min(5, N - 1), K - 1].set(0)

        out = jax.block_until_ready(baseline_color(feats, nbr, row_tile=row_tile))
        ref = jax.block_until_ready(_reference(feats, nbr))
        assert out.shape == (N, (K + 1) * C), out.shape
        err = float(jnp.max(jnp.abs(out - ref)))
        assert jnp.allclose(out, ref, atol=1e-5, rtol=1e-5), err

    run_case(0, 64, 9, 4)                 # small: one tile, tile == N
    run_case(1, 100, 11, 3)               # N not a multiple of 8 -> row padding path
    run_case(2, 200, 9, 4, row_tile=64)   # multi-tile grid: accumulation + resident feat
    print("KERNEL_OK")
</pallas_src>

<mosaic_0001>
module attributes {stable_mosaic.version = 11 : i64} {
  func.func @_col_sumsq_kernel(%arg0: i32, %arg1: memref<64x9xf32, #tpu.memory_space<vmem>>, %arg2: memref<1x9xf32, #tpu.memory_space<vmem>>, %arg3: memref<1x9xf32, #tpu.memory_space<vmem>>) attributes {dimension_semantics = [#tpu.dimension_semantics<arbitrary>], iteration_bounds = array<i64: 1>, scalar_prefetch = 0 : i64, scratch_operands = 1 : i64, tpu.core_type = #tpu.core_type<tc>, window_params = [{transform_indices = @transform_0, window_bounds = array<i64: 64, 9>}, {pipeline_mode = #tpu.pipeline_mode<synchronous>, transform_indices = @transform_1, window_bounds = array<i64: 1, 9>}]} {
    %c0_i32 = arith.constant 0 : i32
    %0 = arith.cmpi eq, %arg0, %c0_i32 : i32
    %1 = arith.extui %0 : i1 to i32
    %c0_i32_0 = arith.constant 0 : i32
    %2 = arith.cmpi ne, %1, %c0_i32_0 : i32
    scf.if %2 {
      %cst_8 = arith.constant 0.000000e+00 : f32
      %13 = vector.broadcast %cst_8 : f32 to vector<1x9xf32>
      %c0_9 = arith.constant 0 : index
      %c0_10 = arith.constant 0 : index
      %14 = vector.load %arg3[%c0_9, %c0_10] : memref<1x9xf32, #tpu.memory_space<vmem>>, vector<1x9xf32>
      tpu.vector_store %arg3[%c0_9, %c0_10], %13 {strides = array<i32>} : memref<1x9xf32, #tpu.memory_space<vmem>>, vector<1x9xf32>,
    } else {
    }
    %c0 = arith.constant 0 : index
    %c0_1 = arith.constant 0 : index
    %3 = vector.load %arg1[%c0, %c0_1] : memref<64x9xf32, #tpu.memory_space<vmem>>, vector<64x9xf32>
    %c0_2 = arith.constant 0 : index
    %c0_3 = arith.constant 0 : index
    %4 = vector.load %arg3[%c0_2, %c0_3] : memref<1x9xf32, #tpu.memory_space<vmem>>, vector<1x9xf32>
    %5 = arith.mulf %3, %3 : vector<64x9xf32>
    %cst = arith.constant dense<0.000000e+00> : vector<9xf32>
    %6 = vector.multi_reduction <add>, %5, %cst [0] : vector<64x9xf32> to vector<9xf32>
    %7 = vector.shape_cast %6 : vector<9xf32> to vector<1x9xf32>
    %8 = arith.addf %4, %7 : vector<1x9xf32>
    %c0_4 = arith.constant 0 : index
    %c0_5 = arith.constant 0 : index
    %9 = vector.load %arg3[%c0_4, %c0_5] : memref<1x9xf32, #tpu.memory_space<vmem>>, vector<1x9xf32>
    tpu.vector_store %arg3[%c0_4, %c0_5], %8 {strides = array<i32>} : memref<1x9xf32, #tpu.memory_space<vmem>>, vector<1x9xf32>,
    %c0_i32_6 = arith.constant 0 : i32
    %10 = arith.cmpi eq, %arg0, %c0_i32_6 : i32
    %11 = arith.extui %10 : i1 to i32
    %c0_i32_7 = arith.constant 0 : i32
    %12 = arith.cmpi ne, %11, %c0_i32_7 : i32
    scf.if %12 {
      %c0_8 = arith.constant 0 : index
      %c0_9 = arith.constant 0 : index
      %13 = vector.load %arg3[%c0_8, %c0_9] : memref<1x9xf32, #tpu.memory_space<vmem>>, vector<1x9xf32>
      %c0_10 = arith.constant 0 : index
      %c0_11 = arith.constant 0 : index
      %14 = vector.load %arg2[%c0_10, %c0_11] : memref<1x9xf32, #tpu.memory_space<vmem>>, vector<1x9xf32>
      tpu.vector_store %arg2[%c0_10, %c0_11], %13 {strides = array<i32>} : memref<1x9xf32, #tpu.memory_space<vmem>>, vector<1x9xf32>,
    } else {
    }
    return
  }
  func.func @transform_0(%arg0: i32) -> (i32, i32) {
    %c0_i32 = arith.constant 0 : i32
    %c0_i32_0 = arith.constant 0 : i32
    return %arg0, %c0_i32 : i32, i32
  }
  func.func @transform_1(%arg0: i32) -> (i32, i32) {
    %c0_i32 = arith.constant 0 : i32
    %c0_i32_0 = arith.constant 0 : i32
    %c0_i32_1 = arith.constant 0 : i32
    return %c0_i32, %c0_i32_0 : i32, i32
  }
}

</mosaic_0001>

<llo_original>
// kernel: tpu_custom_call.1
$region0: #{tpu_custom_call.1}
  #allocation0 [shape = 'u32[]', space=smem, size = 0x4, offset = 0x4, fixed_abs, tag = 'smem constant byte address 0x4 - core index']
  #allocation1 [shape = 'u32[72,128]{1,0:T(1,128)}', space=vmem, size = 0x9000, scoped, tag = 'internal scratch']
  #allocation2 [shape = 'f32[1,9]{1,0:T(1,128)}', space=vmem, size = 0x200, scoped, tag = 'scratch operand']
  %s0 = inlined_call_operand.vmem [shape: f32[64,9], index: 0, kind: input, shape index: {}]
  %s1 = inlined_call_operand.hbm [shape: f32[1,9], index: 1, kind: output, shape index: {}]
  %s2 = sld [smem:[#allocation0]]
  $region22: #{tpu_custom_call.1} parent=0
    _
  %s4 = ssub.s32 1, %s2
  %s5 = scalar_select 0, %s4, %s2
  $region1: #{tpu_custom_call.1} parent=0
    #allocation3 [shape = 'u8[512]{0}', space=vmem, size = 0x400, scoped, tag = 'output window, operand 0, single buffered']
    #allocation4 [shape = 's32[1]{0}', space=sflag, size = 0x4, scoped, tag = 'scoped memory for tpu_custom_call.1']
    %6 = vsyncpa [#allocation4], 0
    // Predicated region
    $region2: #{tpu_custom_call.1} parent=1 // pred_check
      _
    $region3: #{tpu_custom_call.1} parent=1 // pred_check_branch
      %8 = sbr.rel (0) target = $region5
    $region4: #{tpu_custom_call.1} parent=1 // pred_region
      _
    $region5: #{tpu_custom_call.1} parent=1 // pred_fallthru
      _
    %p9 = scmp.eq.s32.totalorder 0, 0
    // Predicated region
    $region6: #{tpu_custom_call.1} parent=1 // pred_check
      %p10 = pneg %p9
    $region7: #{tpu_custom_call.1} parent=1 // pred_check_branch
      %12 = sbr.rel (%p10) target = $region9
    $region8: #{tpu_custom_call.1} parent=1 // pred_region
      %vm13 = vcmask 65536
      %14 = vst.msk [vmem:[#allocation2] sm:$0x1] %vm13, 0.0
    $region9: #{tpu_custom_call.1} parent=1 // pred_fallthru
      _
    %v15 = vld [vmem:[%s0] sm:$0xff]
    %v16 = vld [vmem:[%s0 + $0x8] sm:$0xff]
    %v17 = vld [vmem:[%s0 + $0x10] sm:$0xff]
    %v18 = vld [vmem:[%s0 + $0x18] sm:$0xff]
    %v19 = vld [vmem:[%s0 + $0x20] sm:$0xff]
    %v20 = vld [vmem:[%s0 + $0x28] sm:$0xff]
    %v21 = vld [vmem:[%s0 + $0x30] sm:$0xff]
    %v22 = vld [vmem:[%s0 + $0x38] sm:$0xff]
    %v23 = vld [vmem:[#allocation2] sm:$0x1]
    %v24 = vmul.f32 %v15, %v15
    %v25 = vmul.f32 %v16, %v16
    %v26 = vmul.f32 %v17, %v17
    %v27 = vmul.f32 %v18, %v18
    %v28 = vmul.f32 %v19, %v19
    %v29 = vmul.f32 %v20, %v20
    %v30 = vmul.f32 %v21, %v21
    %v31 = vmul.f32 %v22, %v22
    %vm32 = vcmask 72704
    %v33 = vsel %vm32, %v24, 0.0
    %v34 = vsel %vm32, %v25, 0.0
    %v35 = vadd.f32 %v33, %v34
    %v36 = vsel %vm32, %v26, 0.0
    %v37 = vadd.f32 %v35, %v36
    %v38 = vsel %vm32, %v27, 0.0
    %v39 = vadd.f32 %v37, %v38
    %v40 = vsel %vm32, %v28, 0.0
    %v41 = vadd.f32 %v39, %v40
    %v42 = vsel %vm32, %v29, 0.0
    %v43 = vadd.f32 %v41, %v42
    %v44 = vsel %vm32, %v30, 0.0
    %v45 = vadd.f32 %v43, %v44
    %v46 = vsel %vm32, %v31, 0.0
    %v47 = vadd.f32 %v45, %v46
    %v48 = vrot.slane %v47, 4
    %v49 = vadd.f32 %v47, %v48
    %v50 = vrot.slane %v49, 2
    %v51 = vadd.f32 %v49, %v50
    %v52 = vrot.slane %v51, 1
    %v53 = vadd.f32 %v51, %v52
    %v54 = vadd.f32 %v23, %v53
    %vm55 = vcmask 65536
    %56 = vst.msk [vmem:[#allocation2] sm:$0x1] %vm55, %v54
    // Predicated region
    $region10: #{tpu_custom_call.1} parent=1 // pred_check
      %p57 = pneg %p9
    $region11: #{tpu_custom_call.1} parent=1 // pred_check_branch
      %59 = sbr.rel (%p57) target = $region13
    $region12: #{tpu_custom_call.1} parent=1 // pred_region
      %v60 = vld [vmem:[#allocation2] sm:$0x1]
      %61 = vst.msk [vmem:[#allocation3] sm:$0x1] %vm55, %v60
    $region13: #{tpu_custom_call.1} parent=1 // pred_fallthru
      _
    // Predicated region
    $region14: #{tpu_custom_call.1} parent=1 // pred_check
      _
    $region15: #{tpu_custom_call.1} parent=1 // pred_check_branch
      %63 = sbr.rel (0) target = $region17
    $region16: #{tpu_custom_call.1} parent=1 // pred_region
      %65 = vsyncadd [#allocation4], 0
      %s67 = sshll.u32 [#allocation3], 4
      %s68 = int_to_ptr.vmem [resolvable:$true] %s67
      %s69 = sshll.u32 %s1, 4
      %s70 = int_to_ptr.hbm [resolvable:$true] %s69
      %72 = dma.vmem_to_hbm [thread:$0]  %s68, 16, %s70, [#allocation4]
    $region17: #{tpu_custom_call.1} parent=1 // pred_fallthru
      _
    // Predicated region
    $region18: #{tpu_custom_call.1} parent=1 // pred_check
      _
    $region19: #{tpu_custom_call.1} parent=1 // pred_check_branch
      %74 = sbr.rel (0) target = $region21
    $region20: #{tpu_custom_call.1} parent=1 // pred_region
      %76 = dma.done [#allocation4], 16
    $region21: #{tpu_custom_call.1} parent=1 // pred_fallthru
      _
    %77 = vsyncpa [#allocation4], 1

</llo_original>
